<compile_context>
chip_gen: v5e
topology: v5e:2x2
jax: 0.10.0
libtpu: 0.0.40
codegen_flags: <defaults>
</compile_context>

<pallas_src>
import functools

import numpy as np
import jax
import jax.numpy as jnp
from jax.experimental import pallas as pl
from jax.experimental.pallas import tpu as pltpu


# --------------------------------------------------------------------------------------
# Fused Pallas kernel: conv1 + BN + LeakyReLU + minibatch-stddev + last 4x4 conv
# --------------------------------------------------------------------------------------
def _fused_disc_kernel(p1t_ref, w_ref, aux_ref, o_ref, *,
                       batch, c1, k1, ho, wo, group, g2, ksz):
    # p1t : (K1, M)       bf16 transposed im2col patches, M = B*ho*wo (lane-dense)
    # w   : (C1+ksz, Kmax) bf16: rows 0..C1-1 = first-conv (C1, K1),
    #                      rows C1..C1+ksz-1 = kw-folded last conv (ksz, ksz*C1)
    # aux : (C1, 3)       f32: gamma | beta | sum of last-conv taps of the stddev channel
    # o   : (1, M)        f32 last-conv value at every (b, r, c); wrapper keeps valid part
    hw = ho * wo
    m_tot = batch * hw

    w1m = w_ref[0:c1, 0:k1]                         # (C1, K1)      bf16
    w2m = w_ref[c1:c1 + ksz, 0:ksz * c1]            # (ksz, ksz*C1) bf16, row=kh, col=(kw,c)

    # ---- conv1 (4x4, s=2, p=1) as one lane-dense MXU matmul, f32 accumulation ----
    y = jnp.dot(w1m, p1t_ref[...], preferred_element_type=jnp.float32)   # (C1, M)

    # ---- BatchNorm2d (train-mode stats over N,H,W == lanes), folded into one FMA ----
    # (conv bias dropped: a per-channel constant before train-mode BN cancels exactly)
    mean = jnp.mean(y, axis=1, keepdims=True)
    var = jnp.mean((y - mean) ** 2, axis=1, keepdims=True)      # biased, like torch
    scale = aux_ref[:, 0:1] * jax.lax.rsqrt(var + 1e-5)         # gamma
    shift = aux_ref[:, 1:2] - mean * scale                      # beta
    y1 = y * scale + shift
    y1 = jnp.where(y1 > 0.0, y1, 0.2 * y1)                      # LeakyReLU(0.2), f32

    ws = aux_ref[0:1, 2:3]                                      # (1,1) stddev-channel tap sum

    # ---- minibatch stddev on dense full-width vregs (valid since m_tot == group*hw) ----
    if g2 == 1:
        mu = y1
        for k in range(1, group):
            mu = mu + pltpu.roll(y1, shift=k * hw, axis=1)
        mu = mu * (1.0 / group)
        d2 = (y1 - mu) ** 2
        v = d2
        for k in range(1, group):
            v = v + pltpu.roll(d2, shift=k * hw, axis=1)
        v = v * (1.0 / group)
        sd_term = jnp.mean(jnp.sqrt(v + 1e-8)) * ws             # (1,1), same for all samples
    else:
        # Fallback for batch > stddev_group (per group-column scalars); rarely used.
        s_vals = []
        for j in range(g2):
            cols = [y1[:, (g * g2 + j) * hw:(g * g2 + j + 1) * hw] for g in range(group)]
            mu = sum(cols) / group
            v = sum((t - mu) ** 2 for t in cols) / group
            s_vals.append(jnp.mean(jnp.sqrt(v + 1e-8)))
        lane = jax.lax.broadcasted_iota(jnp.int32, (1, m_tot), 1)
        j_of_lane = (lane // hw) % g2
        sd = jnp.zeros((1, m_tot), jnp.float32)
        for j in range(g2):
            sd = jnp.where(j_of_lane == j, s_vals[j], sd)
        sd_term = sd * ws

    # ---- last conv (4x4, valid, no bias) ----
    # kw taps folded into the MXU contraction: 3 dense lane rolls build (ksz*C1, M),
    # one matmul yields the per-kh partial sums, 3 single-row rolls handle kh*wo offsets.
    parts = [y1]
    for kw in range(1, ksz):
        parts.append(pltpu.roll(y1, shift=m_tot - kw, axis=1))  # row m picks up y1[., m+kw]
    ybig = jnp.concatenate(parts, axis=0).astype(jnp.bfloat16)  # (ksz*C1, M), row = kw*C1+c
    z = jnp.dot(w2m, ybig, preferred_element_type=jnp.float32)  # (ksz, M), row = kh
    acc = z[0:1, :]
    for kh in range(1, ksz):
        acc = acc + pltpu.roll(z[kh:kh + 1, :], shift=m_tot - kh * wo, axis=1)

    o_ref[...] = acc + sd_term


def fused_single_disc(p1t, wslab, aux, *, batch, c1, k1, ho, wo, group, g2, ksz):
    m = p1t.shape[1]
    kernel = functools.partial(_fused_disc_kernel, batch=batch, c1=c1, k1=k1,
                               ho=ho, wo=wo, group=group, g2=g2, ksz=ksz)
    cost = pl.CostEstimate(
        flops=2 * (c1 * k1 * m + ksz * (ksz * c1) * m),
        transcendentals=c1 * m + c1,
        bytes_accessed=int(p1t.size * p1t.dtype.itemsize
                           + wslab.size * wslab.dtype.itemsize
                           + aux.size * aux.dtype.itemsize + m * 4))
    return pl.pallas_call(
        kernel,
        out_shape=jax.ShapeDtypeStruct((1, m), jnp.float32),
        grid=(1,),
        in_specs=[
            pl.BlockSpec(p1t.shape, lambda i: (0, 0)),
            pl.BlockSpec(wslab.shape, lambda i: (0, 0)),
            pl.BlockSpec(aux.shape, lambda i: (0, 0)),
        ],
        out_specs=pl.BlockSpec((1, m), lambda i: (0, 0)),
        compiler_params=pltpu.CompilerParams(dimension_semantics=("arbitrary",)),
        cost_estimate=cost,
    )(p1t, wslab, aux)


# --------------------------------------------------------------------------------------
# Glue: patches, weight packing, spectral norm (weight re-param), init, forward wrapper
# --------------------------------------------------------------------------------------
def spectral_normalize(w, key, n_iter=1):
    # torch.nn.utils.spectral_norm semantics: divide W by sigma from power iteration
    # on W.reshape(out, -1); deterministic u init (synthetic params).
    wm = w.reshape(w.shape[0], -1)
    u = jax.random.normal(key, (wm.shape[0],), jnp.float32)
    u = u / (jnp.linalg.norm(u) + 1e-12)
    v = None
    for _ in range(n_iter):
        v = wm.T @ u
        v = v / (jnp.linalg.norm(v) + 1e-12)
        u = wm @ v
        u = u / (jnp.linalg.norm(u) + 1e-12)
    sigma = u @ (wm @ v)
    return w / sigma


def init_params(key, nc=4, c1=16):
    k1, k2, k3, k4, k5 = jax.random.split(key, 5)
    w1 = jax.random.normal(k1, (c1, nc, 4, 4), jnp.float32) * 0.2       # conv 4x4 s2 p1
    b1 = jax.random.normal(k2, (c1,), jnp.float32) * 0.1                # cancels under BN
    w2 = jax.random.normal(k3, (1, c1 + 1, 4, 4), jnp.float32) * 0.2    # last conv, no bias
    w1 = spectral_normalize(w1, k4)
    w2 = spectral_normalize(w2, k5)
    gamma = jnp.ones((c1,), jnp.float32)     # BatchNorm2d default init
    beta = jnp.zeros((c1,), jnp.float32)
    return {"w1": w1, "b1": b1, "gamma": gamma, "beta": beta, "w2": w2}


def single_disc_forward(x, params, c=None, alpha=0.0):
    del c, alpha                              # unused by the PyTorch forward as well
    B, nc_in, H, W = x.shape
    w1 = params["w1"]
    c1 = w1.shape[0]
    ksz = 4
    k1 = nc_in * ksz * ksz

    # First-conv patches in ONE XLA op, already lane-dense / transposed:
    # out-spec "CNHW" gives (Cin*ksz*ksz, B, ho, wo) with feature order (c, kh, kw), so a
    # plain reshape yields (K1, B*ho*wo) with columns ordered (b, r, c).
    patches = jax.lax.conv_general_dilated_patches(
        x.astype(jnp.bfloat16), filter_shape=(ksz, ksz), window_strides=(2, 2),
        padding=((1, 1), (1, 1)), dimension_numbers=("NCHW", "OIHW", "CNHW"))
    ho = (H + 2 - ksz) // 2 + 1
    wo = (W + 2 - ksz) // 2 + 1
    p1t = patches.reshape(k1, B * ho * wo)

    # Weight slab: first-conv (C1, K1) and kw-folded last-conv (ksz, ksz*C1) in one bf16
    # array (padded to a common width) -> single DMA.
    w2 = params["w2"]
    w1m = w1.reshape(c1, k1).astype(jnp.bfloat16)
    w2m = jnp.transpose(w2[0, :c1], (1, 2, 0)).reshape(ksz, ksz * c1).astype(jnp.bfloat16)
    kmax = max(k1, ksz * c1)
    wslab = jnp.concatenate([jnp.pad(w1m, ((0, 0), (0, kmax - k1))),
                             jnp.pad(w2m, ((0, 0), (0, kmax - ksz * c1)))], axis=0)

    # Aux block: gamma | beta | sum of last-conv taps of the (spatially constant) stddev ch.
    ws_sum = jnp.sum(w2[0, c1])
    aux = jnp.stack([params["gamma"], params["beta"],
                     jnp.broadcast_to(ws_sum, (c1,))], axis=1)           # (C1, 3) f32

    group = min(B, 4)                         # stddev_group = 4
    assert B % group == 0                     # same constraint as torch's view(group, -1, ...)
    g2 = B // group

    ho2, wo2 = ho - (ksz - 1), wo - (ksz - 1)
    assert ho2 > 0 and wo2 > 0                # roll-wrap invariant needs a discarded border

    y = fused_single_disc(p1t, wslab, aux, batch=B, c1=c1, k1=k1,
                          ho=ho, wo=wo, group=group, g2=g2, ksz=ksz)

    # Keep only valid conv positions; lanes that wrapped in the cyclic rolls live in the
    # discarded r >= ho2 / c >= wo2 region.
    out = y.reshape(B, ho, wo)[:, :ho2, :wo2]
    return out.reshape(B, ho2 * wo2)          # == out.view(batch, -1)


# --------------------------------------------------------------------------------------
# Pure-JAX reference (mirrors the PyTorch forward) for a sanity check
# --------------------------------------------------------------------------------------
def reference_forward(x, params):
    y = jax.lax.conv_general_dilated(x, params["w1"], (2, 2), ((1, 1), (1, 1)),
                                     dimension_numbers=("NCHW", "OIHW", "NCHW"))
    y = y + params["b1"][None, :, None, None]
    mean = jnp.mean(y, axis=(0, 2, 3), keepdims=True)
    var = jnp.mean((y - mean) ** 2, axis=(0, 2, 3), keepdims=True)
    y = (y - mean) * jax.lax.rsqrt(var + 1e-5)
    y = y * params["gamma"][None, :, None, None] + params["beta"][None, :, None, None]
    y = jnp.where(y > 0, y, 0.2 * y)
    B, C, H, W = y.shape
    group = min(B, 4)
    st = y.reshape(group, B // group, 1, C, H, W)
    sd = jnp.sqrt(jnp.var(st, axis=0) + 1e-8)
    sd = jnp.mean(sd, axis=(2, 3, 4), keepdims=True)[:, :, 0]
    sd = jnp.tile(sd, (group, 1, H, W))
    yc = jnp.concatenate([y, sd], axis=1)
    out = jax.lax.conv_general_dilated(yc, params["w2"], (1, 1), ((0, 0), (0, 0)),
                                       dimension_numbers=("NCHW", "OIHW", "NCHW"))
    return out.reshape(B, -1)


if __name__ == "__main__":
    key = jax.random.PRNGKey(0)
    kx, kp = jax.random.split(key)
    B, NC, SZ = 4, 4, 16
    x = jax.random.normal(kx, (B, NC, SZ, SZ), jnp.float32)
    params = init_params(kp, nc=NC, c1=16)
    c = jnp.zeros((B, 0), jnp.float32)        # conditioning arg, unused by forward

    fwd = jax.jit(single_disc_forward)
    out = jax.block_until_ready(fwd(x, params, c, 0.0))

    assert out.shape == (B, 25), out.shape
    ref = reference_forward(x, params)
    np.testing.assert_allclose(np.asarray(out), np.asarray(ref), rtol=2e-2, atol=2e-2)
    print("KERNEL_OK")
</pallas_src>

<mosaic_0001>
module attributes {stable_mosaic.version = 11 : i64} {
  func.func @_fused_disc_kernel(%arg0: i32, %arg1: memref<64x256xbf16, #tpu.memory_space<vmem>>, %arg2: memref<20x64xbf16, #tpu.memory_space<vmem>>, %arg3: memref<16x3xf32, #tpu.memory_space<vmem>>, %arg4: memref<1x256xf32, #tpu.memory_space<vmem>>) attributes {dimension_semantics = [#tpu.dimension_semantics<arbitrary>], iteration_bounds = array<i64: 1>, scalar_prefetch = 0 : i64, scratch_operands = 0 : i64, tpu.core_type = #tpu.core_type<tc>, window_params = [{pipeline_mode = #tpu.pipeline_mode<synchronous>, transform_indices = @transform_0, window_bounds = array<i64: 64, 256>}, {pipeline_mode = #tpu.pipeline_mode<synchronous>, transform_indices = @transform_1, window_bounds = array<i64: 20, 64>}, {pipeline_mode = #tpu.pipeline_mode<synchronous>, transform_indices = @transform_2, window_bounds = array<i64: 16, 3>}, {pipeline_mode = #tpu.pipeline_mode<synchronous>, transform_indices = @transform_3, window_bounds = array<i64: 1, 256>}]} {
    %c0 = arith.constant 0 : index
    %c0_0 = arith.constant 0 : index
    %0 = vector.load %arg2[%c0, %c0_0] : memref<20x64xbf16, #tpu.memory_space<vmem>>, vector<16x64xbf16>
    %c16 = arith.constant 16 : index
    %c0_1 = arith.constant 0 : index
    %1 = vector.load %arg2[%c16, %c0_1] : memref<20x64xbf16, #tpu.memory_space<vmem>>, vector<4x64xbf16>
    %c0_2 = arith.constant 0 : index
    %c0_3 = arith.constant 0 : index
    %2 = vector.load %arg1[%c0_2, %c0_3] : memref<64x256xbf16, #tpu.memory_space<vmem>>, vector<64x256xbf16>
    %cst = arith.constant dense<0.000000e+00> : vector<16x256xf32>
    %3 = tpu.matmul %0, %2, %cst {dimension_numbers = #tpu.dot_dimension_numbers<[1], [0], [0], [1], [0, 0, 1, 1], [], []>} : vector<16x64xbf16>, vector<64x256xbf16>, vector<16x256xf32> -> vector<16x256xf32>
    %cst_4 = arith.constant dense<0.000000e+00> : vector<16xf32>
    %4 = vector.multi_reduction <add>, %3, %cst_4 [1] : vector<16x256xf32> to vector<16xf32>
    %5 = vector.shape_cast %4 : vector<16xf32> to vector<16x1xf32>
    %cst_5 = arith.constant 2.560000e+02 : f32
    %6 = vector.broadcast %cst_5 : f32 to vector<16x1xf32>
    %7 = arith.divf %5, %6 : vector<16x1xf32>
    %8 = vector.broadcast %7 : vector<16x1xf32> to vector<16x256xf32>
    %9 = arith.subf %3, %8 : vector<16x256xf32>
    %10 = arith.mulf %9, %9 : vector<16x256xf32>
    %cst_6 = arith.constant dense<0.000000e+00> : vector<16xf32>
    %11 = vector.multi_reduction <add>, %10, %cst_6 [1] : vector<16x256xf32> to vector<16xf32>
    %12 = vector.shape_cast %11 : vector<16xf32> to vector<16x1xf32>
    %cst_7 = arith.constant 2.560000e+02 : f32
    %13 = vector.broadcast %cst_7 : f32 to vector<16x1xf32>
    %14 = arith.divf %12, %13 : vector<16x1xf32>
    %c0_8 = arith.constant 0 : index
    %c0_9 = arith.constant 0 : index
    %15 = vector.load %arg3[%c0_8, %c0_9] : memref<16x3xf32, #tpu.memory_space<vmem>>, vector<16x1xf32>
    %cst_10 = arith.constant 9.99999974E-6 : f32
    %16 = vector.broadcast %cst_10 : f32 to vector<16x1xf32>
    %17 = arith.addf %14, %16 : vector<16x1xf32>
    %18 = math.rsqrt %17 : vector<16x1xf32>
    %19 = arith.mulf %15, %18 : vector<16x1xf32>
    %c0_11 = arith.constant 0 : index
    %c1 = arith.constant 1 : index
    %20 = vector.load %arg3[%c0_11, %c1] : memref<16x3xf32, #tpu.memory_space<vmem>>, vector<16x1xf32>
    %21 = arith.mulf %7, %19 : vector<16x1xf32>
    %22 = arith.subf %20, %21 : vector<16x1xf32>
    %23 = vector.broadcast %19 : vector<16x1xf32> to vector<16x256xf32>
    %24 = arith.mulf %3, %23 : vector<16x256xf32>
    %25 = vector.broadcast %22 : vector<16x1xf32> to vector<16x256xf32>
    %26 = arith.addf %24, %25 : vector<16x256xf32>
    %cst_12 = arith.constant 0.000000e+00 : f32
    %27 = vector.broadcast %cst_12 : f32 to vector<16x256xf32>
    %28 = arith.cmpf ogt, %26, %27 : vector<16x256xf32>
    %cst_13 = arith.constant 2.000000e-01 : f32
    %29 = vector.broadcast %cst_13 : f32 to vector<16x256xf32>
    %30 = arith.mulf %29, %26 : vector<16x256xf32>
    %31 = arith.select %28, %26, %30 : vector<16x256xi1>, vector<16x256xf32>
    %c0_14 = arith.constant 0 : index
    %c2 = arith.constant 2 : index
    %32 = vector.load %arg3[%c0_14, %c2] : memref<16x3xf32, #tpu.memory_space<vmem>>, vector<1x1xf32>
    %c64_i32 = arith.constant 64 : i32
    %33 = tpu.dynamic_rotate %31 by %c64_i32 dim 1 : vector<16x256xf32>, i32 -> vector<16x256xf32>
    %34 = arith.addf %31, %33 : vector<16x256xf32>
    %c128_i32 = arith.constant 128 : i32
    %35 = tpu.dynamic_rotate %31 by %c128_i32 dim 1 : vector<16x256xf32>, i32 -> vector<16x256xf32>
    %36 = arith.addf %34, %35 : vector<16x256xf32>
    %c192_i32 = arith.constant 192 : i32
    %37 = tpu.dynamic_rotate %31 by %c192_i32 dim 1 : vector<16x256xf32>, i32 -> vector<16x256xf32>
    %38 = arith.addf %36, %37 : vector<16x256xf32>
    %cst_15 = arith.constant 2.500000e-01 : f32
    %39 = vector.broadcast %cst_15 : f32 to vector<16x256xf32>
    %40 = arith.mulf %38, %39 : vector<16x256xf32>
    %41 = arith.subf %31, %40 : vector<16x256xf32>
    %42 = arith.mulf %41, %41 : vector<16x256xf32>
    %c64_i32_16 = arith.constant 64 : i32
    %43 = tpu.dynamic_rotate %42 by %c64_i32_16 dim 1 : vector<16x256xf32>, i32 -> vector<16x256xf32>
    %44 = arith.addf %42, %43 : vector<16x256xf32>
    %c128_i32_17 = arith.constant 128 : i32
    %45 = tpu.dynamic_rotate %42 by %c128_i32_17 dim 1 : vector<16x256xf32>, i32 -> vector<16x256xf32>
    %46 = arith.addf %44, %45 : vector<16x256xf32>
    %c192_i32_18 = arith.constant 192 : i32
    %47 = tpu.dynamic_rotate %42 by %c192_i32_18 dim 1 : vector<16x256xf32>, i32 -> vector<16x256xf32>
    %48 = arith.addf %46, %47 : vector<16x256xf32>
    %cst_19 = arith.constant 2.500000e-01 : f32
    %49 = vector.broadcast %cst_19 : f32 to vector<16x256xf32>
    %50 = arith.mulf %48, %49 : vector<16x256xf32>
    %cst_20 = arith.constant 9.99999993E-9 : f32
    %51 = vector.broadcast %cst_20 : f32 to vector<16x256xf32>
    %52 = arith.addf %50, %51 : vector<16x256xf32>
    %53 = math.sqrt %52 : vector<16x256xf32>
    %54 = vector.shape_cast %53 : vector<16x256xf32> to vector<1x16x256xf32>
    %cst_21 = arith.constant dense<0.000000e+00> : vector<1xf32>
    %55 = vector.multi_reduction <add>, %54, %cst_21 [1, 2] : vector<1x16x256xf32> to vector<1xf32>
    %56 = vector.shape_cast %55 : vector<1xf32> to vector<1x1x1xf32>
    %57 = vector.extract %56[0, 0, 0] : f32 from vector<1x1x1xf32>
    %cst_22 = arith.constant 4.096000e+03 : f32
    %58 = arith.divf %57, %cst_22 : f32
    %59 = vector.broadcast %58 : f32 to vector<1x1xf32>
    %60 = arith.mulf %59, %32 : vector<1x1xf32>
    %c255_i32 = arith.constant 255 : i32
    %61 = tpu.dynamic_rotate %31 by %c255_i32 dim 1 : vector<16x256xf32>, i32 -> vector<16x256xf32>
    %c254_i32 = arith.constant 254 : i32
    %62 = tpu.dynamic_rotate %31 by %c254_i32 dim 1 : vector<16x256xf32>, i32 -> vector<16x256xf32>
    %c253_i32 = arith.constant 253 : i32
    %63 = tpu.dynamic_rotate %31 by %c253_i32 dim 1 : vector<16x256xf32>, i32 -> vector<16x256xf32>
    %64 = tpu.concatenate %31, %61, %62, %63 in 0 : vector<16x256xf32>, vector<16x256xf32>, vector<16x256xf32>, vector<16x256xf32> -> vector<64x256xf32>
    %65 = arith.truncf %64 : vector<64x256xf32> to vector<64x256xbf16>
    %cst_23 = arith.constant dense<0.000000e+00> : vector<4x256xf32>
    %66 = tpu.matmul %1, %65, %cst_23 {dimension_numbers = #tpu.dot_dimension_numbers<[1], [0], [0], [1], [0, 0, 1, 1], [], []>} : vector<4x64xbf16>, vector<64x256xbf16>, vector<4x256xf32> -> vector<4x256xf32>
    %67 = vector.extract_strided_slice %66 {offsets = [0, 0], sizes = [1, 256], strides = [1, 1]} : vector<4x256xf32> to vector<1x256xf32>
    %68 = vector.extract_strided_slice %66 {offsets = [1, 0], sizes = [1, 256], strides = [1, 1]} : vector<4x256xf32> to vector<1x256xf32>
    %c248_i32 = arith.constant 248 : i32
    %69 = tpu.dynamic_rotate %68 by %c248_i32 dim 1 : vector<1x256xf32>, i32 -> vector<1x256xf32>
    %70 = arith.addf %67, %69 : vector<1x256xf32>
    %71 = vector.extract_strided_slice %66 {offsets = [2, 0], sizes = [1, 256], strides = [1, 1]} : vector<4x256xf32> to vector<1x256xf32>
    %c240_i32 = arith.constant 240 : i32
    %72 = tpu.dynamic_rotate %71 by %c240_i32 dim 1 : vector<1x256xf32>, i32 -> vector<1x256xf32>
    %73 = arith.addf %70, %72 : vector<1x256xf32>
    %74 = vector.extract_strided_slice %66 {offsets = [3, 0], sizes = [1, 256], strides = [1, 1]} : vector<4x256xf32> to vector<1x256xf32>
    %c232_i32 = arith.constant 232 : i32
    %75 = tpu.dynamic_rotate %74 by %c232_i32 dim 1 : vector<1x256xf32>, i32 -> vector<1x256xf32>
    %76 = arith.addf %73, %75 : vector<1x256xf32>
    %77 = vector.broadcast %60 : vector<1x1xf32> to vector<1x256xf32>
    %78 = arith.addf %76, %77 : vector<1x256xf32>
    %c0_24 = arith.constant 0 : index
    %c0_25 = arith.constant 0 : index
    %79 = vector.load %arg4[%c0_24, %c0_25] : memref<1x256xf32, #tpu.memory_space<vmem>>, vector<1x256xf32>
    tpu.vector_store %arg4[%c0_24, %c0_25], %78 {strides = array<i32>} : memref<1x256xf32, #tpu.memory_space<vmem>>, vector<1x256xf32>,
    return
  }
  func.func @transform_0(%arg0: i32) -> (i32, i32) {
    %c0_i32 = arith.constant 0 : i32
    %c0_i32_0 = arith.constant 0 : i32
    %c0_i32_1 = arith.constant 0 : i32
    return %c0_i32, %c0_i32_0 : i32, i32
  }
  func.func @transform_1(%arg0: i32) -> (i32, i32) {
    %c0_i32 = arith.constant 0 : i32
    %c0_i32_0 = arith.constant 0 : i32
    %c0_i32_1 = arith.constant 0 : i32
    return %c0_i32, %c0_i32_0 : i32, i32
  }
  func.func @transform_2(%arg0: i32) -> (i32, i32) {
    %c0_i32 = arith.constant 0 : i32
    %c0_i32_0 = arith.constant 0 : i32
    %c0_i32_1 = arith.constant 0 : i32
    return %c0_i32, %c0_i32_0 : i32, i32
  }
  func.func @transform_3(%arg0: i32) -> (i32, i32) {
    %c0_i32 = arith.constant 0 : i32
    %c0_i32_0 = arith.constant 0 : i32
    %c0_i32_1 = arith.constant 0 : i32
    return %c0_i32, %c0_i32_0 : i32, i32
  }
}

</mosaic_0001>

<llo_original>
// kernel: single_disc_forward.1
$region0: #{single_disc_forward.1}
  #allocation0 [shape = 'u32[]', space=smem, size = 0x4, offset = 0x4, fixed_abs, tag = 'smem constant byte address 0x4 - core index']
  #allocation1 [shape = 'u32[72,128]{1,0:T(1,128)}', space=vmem, size = 0x9000, scoped, tag = 'internal scratch']
  %s0 = inlined_call_operand.vmem [shape: bf16[64,256], index: 0, kind: input, shape index: {}]
  %s1 = inlined_call_operand.vmem [shape: bf16[20,64], index: 1, kind: input, shape index: {}]
  %s2 = inlined_call_operand.vmem [shape: f32[16,3], index: 2, kind: input, shape index: {}]
  %s3 = inlined_call_operand.vmem [shape: f32[1,256], index: 3, kind: output, shape index: {}]
  %s4 = sld [smem:[#allocation0]]
  $region22: #{single_disc_forward.1} parent=0
    _
  %s6 = ssub.s32 1, %s4
  %s7 = scalar_select 0, %s6, %s4
  // Predicated region
  $region2: #{single_disc_forward.1} parent=0 // pred_check
    _
  $region3: #{single_disc_forward.1} parent=0 // pred_check_branch
    %9 = sbr.rel (0) target = $region5
  $region4: #{single_disc_forward.1} parent=0 // pred_region
    _
  $region5: #{single_disc_forward.1} parent=0 // pred_fallthru
    _
  // Predicated region
  $region6: #{single_disc_forward.1} parent=0 // pred_check
    _
  $region7: #{single_disc_forward.1} parent=0 // pred_check_branch
    %11 = sbr.rel (0) target = $region9
  $region8: #{single_disc_forward.1} parent=0 // pred_region
    _
  $region9: #{single_disc_forward.1} parent=0 // pred_fallthru
    _
  // Predicated region
  $region10: #{single_disc_forward.1} parent=0 // pred_check
    _
  $region11: #{single_disc_forward.1} parent=0 // pred_check_branch
    %13 = sbr.rel (0) target = $region13
  $region12: #{single_disc_forward.1} parent=0 // pred_region
    _
  $region13: #{single_disc_forward.1} parent=0 // pred_fallthru
    _
  %v15 = vld [vmem:[%s1] sm:$0xf]
  %v16 = vld [vmem:[%s1 + $0x4] sm:$0xf]
  %v17 = vld [vmem:[%s1 + $0x8] sm:$0x3]
  %v18 = vld [vmem:[%s0] sm:$0xff]
  %v19 = vld [vmem:[%s0 + $0x8] sm:$0xff]
  %v20 = vld [vmem:[%s0 + $0x10] sm:$0xff]
  %v21 = vld [vmem:[%s0 + $0x18] sm:$0xff]
  %v22 = vld [vmem:[%s0 + $0x20] sm:$0xff]
  %v23 = vld [vmem:[%s0 + $0x28] sm:$0xff]
  %v24 = vld [vmem:[%s0 + $0x30] sm:$0xff]
  %v25 = vld [vmem:[%s0 + $0x38] sm:$0xff]
  %v28 = vunpack.c.l.b16 %v15
  %v29 = vunpack.c.l.b16 %v16
  %v30 = vpack.c.b16 %v29, %v28
  %v39 = vunpack.c.l.b16 %v18
  %v40 = vunpack.c.h.b16 %v18
  %v41 = vunpack.c.l.b16 %v19
  %v42 = vunpack.c.h.b16 %v19
  %v43 = vunpack.c.l.b16 %v20
  %v44 = vunpack.c.h.b16 %v20
  %v45 = vunpack.c.l.b16 %v21
  %v46 = vunpack.c.h.b16 %v21
  %v47 = vunpack.c.l.b16 %v22
  %v48 = vunpack.c.h.b16 %v22
  %v49 = vunpack.c.l.b16 %v23
  %v50 = vunpack.c.h.b16 %v23
  %v51 = vunpack.c.l.b16 %v24
  %v52 = vunpack.c.h.b16 %v24
  %v53 = vunpack.c.l.b16 %v25
  %v54 = vunpack.c.h.b16 %v25
  %v55 = vpack.c.b16 %v41, %v39
  %v56 = vpack.c.b16 %v42, %v40
  %v57 = vpack.c.b16 %v45, %v43
  %v58 = vpack.c.b16 %v46, %v44
  %v59 = vpack.c.b16 %v49, %v47
  %v60 = vpack.c.b16 %v50, %v48
  %v61 = vpack.c.b16 %v53, %v51
  %v62 = vpack.c.b16 %v54, %v52
  %vm71 = vcmask 523264
  %v73 = vsel %vm71, %v30, 0
  %75 = vmatpush.bf16.msra.mxu0 0
  %76 = vmatpush.bf16.msra.mxu0 0
  %77 = vmatpush.bf16.msra.mxu0 0
  %78 = vmatpush.bf16.msra.mxu0 0
  %79 = vmatpush.bf16.msra.mxu0 %v61
  %80 = vmatpush.bf16.msra.mxu0 %v59
  %81 = vmatpush.bf16.msra.mxu0 %v57
  %82 = vmatpush.bf16.msra.mxu0 %v55
  %83 = vmatmul.bf16.gmra.mxu0 %v73
  %v84 = vpop.f32.mrf.mxu0
  %v85 = vadd.f32 0.0, %v84
  %v86 = vpop.f32.mrf.mxu0
  %v87 = vadd.f32 0.0, %v86
  %88 = vdwg.mxu0
  %89 = vmatpush.bf16.msra.mxu0 0
  %90 = vmatpush.bf16.msra.mxu0 0
  %91 = vmatpush.bf16.msra.mxu0 0
  %92 = vmatpush.bf16.msra.mxu0 0
  %93 = vmatpush.bf16.msra.mxu0 %v62
  %94 = vmatpush.bf16.msra.mxu0 %v60
  %95 = vmatpush.bf16.msra.mxu0 %v58
  %96 = vmatpush.bf16.msra.mxu0 %v56
  %97 = vmatmul.bf16.gmra.mxu0 %v73
  %v98 = vpop.f32.mrf.mxu0
  %v99 = vadd.f32 0.0, %v98
  %v100 = vpop.f32.mrf.mxu0
  %v101 = vadd.f32 0.0, %v100
  %102 = vdwg.mxu0
  %v103 = vadd.f32 %v85, %v99
  %104 = vadd.xlane.f32.xlu0 %v103
  %v105 = vpop.xlane.xlu0 %104
  %v106 = vadd.f32 %v87, %v101
  %107 = vadd.xlane.f32.xlu0 %v106
  %v108 = vpop.xlane.xlu0 %107
  %v109 = vrcp.pop 256.0
  %v110 = vmul.f32 256.0, %v109
  %v111 = vsub.f32 1.0, %v110
  %v112 = vmul.f32 %v109, %v111
  %v113 = vadd.f32 %v109, %v112
  %vm114 = vweird.f32 %v109
  %v115 = vsel %vm114, %v109, %v113
  %v116 = vmul.f32 %v105, %v115
  %v117 = vmul.f32 %v108, %v115
  %v118 = vsub.f32 %v85, %v116
  %v119 = vsub.f32 %v99, %v116
  %v120 = vsub.f32 %v87, %v117
  %v121 = vsub.f32 %v101, %v117
  %v122 = vmul.f32 %v118, %v118
  %v123 = vmul.f32 %v119, %v119
  %v124 = vmul.f32 %v120, %v120
  %v125 = vmul.f32 %v121, %v121
  %v126 = vadd.f32 %v122, %v123
  %127 = vadd.xlane.f32.xlu0 %v126
  %v128 = vpop.xlane.xlu0 %127
  %v129 = vadd.f32 %v124, %v125
  %130 = vadd.xlane.f32.xlu0 %v129
  %v131 = vpop.xlane.xlu0 %130
  %v132 = vmul.f32 %v128, %v115
  %v133 = vmul.f32 %v131, %v115
  %v134 = vld [vmem:[%s2] sm:$0xff]
  %v135 = vld [vmem:[%s2 + $0x8] sm:$0xff]
  %v136 = vadd.f32 %v132, 1e-05
  %v137 = vadd.f32 %v133, 1e-05
  %v138 = vrsqrt.pop %v136
  %v139 = vmul.f32 %v138, %v136
  %v140 = vmul.f32 %v139, %v138
  %v141 = vmul.f32 0.5, %v140
  %v142 = vsub.f32 1.5, %v141
  %v143 = vmul.f32 %v138, %v142
  %vm144 = vweird.f32 %v136
  %vm145 = vweird.f32 %v138
  %vm146 = vmor %vm144, %vm145
  %v147 = vsel %vm146, %v138, %v143
  %v148 = vrsqrt.pop %v137
  %v149 = vmul.f32 %v148, %v137
  %v150 = vmul.f32 %v149, %v148
  %v151 = vmul.f32 0.5, %v150
  %v152 = vsub.f32 1.5, %v151
  %v153 = vmul.f32 %v148, %v152
  %vm154 = vweird.f32 %v137
  %vm155 = vweird.f32 %v148
  %vm156 = vmor %vm154, %vm155
  %v157 = vsel %vm156, %v148, %v153
  %v158 = vmul.f32 %v134, %v147
  %v159 = vmul.f32 %v135, %v157
  %v160 = vmul.f32 %v116, %v158
  %v161 = vmul.f32 %v117, %v159
  %164 = vrot.lane.b32.xlu0 %v160, 1
  %v165 = vpop.permute.xlu0 %164
  %166 = vrot.lane.b32.xlu0 %v161, 1
  %v167 = vpop.permute.xlu0 %166
  %v170 = vsub.f32 %v134, %v165
  %v171 = vsub.f32 %v135, %v167
  %173 = vset.pattern.permute.xlu0 0
  %174 = vperm.xlu0 %173, %v158
  %v175 = vpop.permute.xlu0 %174
  %178 = vset.pattern.permute.xlu0 0
  %179 = vperm.xlu0 %178, %v159
  %v180 = vpop.permute.xlu0 %179
  %v182 = vmul.f32 %v85, %v175
  %v183 = vmul.f32 %v99, %v175
  %v184 = vmul.f32 %v87, %v180
  %v185 = vmul.f32 %v101, %v180
  %187 = vset.pattern.permute.xlu0 1
  %188 = vperm.xlu0 %187, %v170
  %v189 = vpop.permute.xlu0 %188
  %192 = vset.pattern.permute.xlu0 1
  %193 = vperm.xlu0 %192, %v171
  %v194 = vpop.permute.xlu0 %193
  %v196 = vadd.f32 %v182, %v189
  %v197 = vadd.f32 %v183, %v189
  %v198 = vadd.f32 %v184, %v194
  %v199 = vadd.f32 %v185, %v194
  %vm200 = vcmp.gt.f32.partialorder %v196, 0.0
  %vm201 = vcmp.gt.f32.partialorder %v197, 0.0
  %vm202 = vcmp.gt.f32.partialorder %v198, 0.0
  %vm203 = vcmp.gt.f32.partialorder %v199, 0.0
  %v204 = vmul.f32 %v196, 0.2
  %v205 = vmul.f32 %v197, 0.2
  %v206 = vmul.f32 %v198, 0.2
  %v207 = vmul.f32 %v199, 0.2
  %v208 = vsel %vm200, %v196, %v204
  %v209 = vsel %vm201, %v197, %v205
  %v210 = vsel %vm202, %v198, %v206
  %v211 = vsel %vm203, %v199, %v207
  %v212 = vld [vmem:[%s2] sm:$0x1]
  %213 = vrot.lane.b32.xlu0 %v208, 64
  %v214 = vpop.permute.xlu0 %213
  %215 = vrot.lane.b32.xlu0 %v210, 64
  %v216 = vpop.permute.xlu0 %215
  %217 = vrot.lane.b32.xlu0 %v209, 64
  %v218 = vpop.permute.xlu0 %217
  %219 = vrot.lane.b32.xlu0 %v211, 64
  %v220 = vpop.permute.xlu0 %219
  %v221 = vlaneseq
  %v222 = vand.u32 %v221, 127
  %vm223 = vcmp.lt.s32.totalorder %v222, 64
  %v224 = vsel %vm223, %v214, %v218
  %v225 = vsel %vm223, %v216, %v220
  %v226 = vsel %vm223, %v218, %v214
  %v227 = vsel %vm223, %v220, %v216
  %v228 = vadd.f32 %v208, %v226
  %v229 = vadd.f32 %v209, %v224
  %v230 = vadd.f32 %v210, %v227
  %v231 = vadd.f32 %v211, %v225
  %v232 = vadd.f32 %v228, %v209
  %v233 = vadd.f32 %v229, %v208
  %v234 = vadd.f32 %v230, %v211
  %v235 = vadd.f32 %v231, %v210
  %v236 = vadd.f32 %v232, %v224
  %v237 = vadd.f32 %v233, %v226
  %v238 = vadd.f32 %v234, %v225
  %v239 = vadd.f32 %v235, %v227
  %v240 = vmul.f32 %v236, 0.25
  %v241 = vmul.f32 %v237, 0.25
  %v242 = vmul.f32 %v238, 0.25
  %v243 = vmul.f32 %v239, 0.25
  %v244 = vsub.f32 %v208, %v240
  %v245 = vsub.f32 %v209, %v241
  %v246 = vsub.f32 %v210, %v242
  %v247 = vsub.f32 %v211, %v243
  %v248 = vmul.f32 %v244, %v244
  %v249 = vmul.f32 %v245, %v245
  %v250 = vmul.f32 %v246, %v246
  %v251 = vmul.f32 %v247, %v247
  %252 = vrot.lane.b32.xlu0 %v248, 64
  %v253 = vpop.permute.xlu0 %252
  %254 = vrot.lane.b32.xlu0 %v250, 64
  %v255 = vpop.permute.xlu0 %254
  %256 = vrot.lane.b32.xlu0 %v249, 64
  %v257 = vpop.permute.xlu0 %256
  %258 = vrot.lane.b32.xlu0 %v251, 64
  %v259 = vpop.permute.xlu0 %258
  %v260 = vsel %vm223, %v253, %v257
  %v261 = vsel %vm223, %v255, %v259
  %v262 = vsel %vm223, %v257, %v253
  %v263 = vsel %vm223, %v259, %v255
  %v264 = vadd.f32 %v248, %v262
  %v265 = vadd.f32 %v249, %v260
  %v266 = vadd.f32 %v250, %v263
  %v267 = vadd.f32 %v251, %v261
  %v268 = vadd.f32 %v264, %v249
  %v269 = vadd.f32 %v265, %v248
  %v270 = vadd.f32 %v266, %v251
  %v271 = vadd.f32 %v267, %v250
  %v272 = vadd.f32 %v268, %v260
  %v273 = vadd.f32 %v269, %v262
  %v274 = vadd.f32 %v270, %v261
  %v275 = vadd.f32 %v271, %v263
  %v276 = vmul.f32 %v272, 0.25
  %v277 = vmul.f32 %v273, 0.25
  %v278 = vmul.f32 %v274, 0.25
  %v279 = vmul.f32 %v275, 0.25
  %v280 = vadd.f32 %v276, 1e-08
  %v281 = vadd.f32 %v277, 1e-08
  %v282 = vadd.f32 %v278, 1e-08
  %v283 = vadd.f32 %v279, 1e-08
  %v284 = vrsqrt.pop %v280
  %v285 = vmul.f32 %v284, %v280
  %v286 = vmul.f32 %v285, %v284
  %v287 = vmul.f32 0.5, %v286
  %v288 = vsub.f32 1.5, %v287
  %v289 = vmul.f32 %v284, %v288
  %v290 = vmul.f32 %v280, %v289
  %vm291 = vcmp.eq.f32.partialorder %v280, inf
  %v292 = vsel %vm291, %v280, %v290
  %vm293 = vcmp.eq.f32.partialorder %v280, 0.0
  %v294 = vand.u32 %v280, 2147483648
  %v295 = vsel %vm293, %v294, %v292
  %v296 = vrsqrt.pop %v281
  %v297 = vmul.f32 %v296, %v281
  %v298 = vmul.f32 %v297, %v296
  %v299 = vmul.f32 0.5, %v298
  %v300 = vsub.f32 1.5, %v299
  %v301 = vmul.f32 %v296, %v300
  %v302 = vmul.f32 %v281, %v301
  %vm303 = vcmp.eq.f32.partialorder %v281, inf
  %v304 = vsel %vm303, %v281, %v302
  %vm305 = vcmp.eq.f32.partialorder %v281, 0.0
  %v306 = vand.u32 %v281, 2147483648
  %v307 = vsel %vm305, %v306, %v304
  %v308 = vrsqrt.pop %v282
  %v309 = vmul.f32 %v308, %v282
  %v310 = vmul.f32 %v309, %v308
  %v311 = vmul.f32 0.5, %v310
  %v312 = vsub.f32 1.5, %v311
  %v313 = vmul.f32 %v308, %v312
  %v314 = vmul.f32 %v282, %v313
  %vm315 = vcmp.eq.f32.partialorder %v282, inf
  %v316 = vsel %vm315, %v282, %v314
  %vm317 = vcmp.eq.f32.partialorder %v282, 0.0
  %v318 = vand.u32 %v282, 2147483648
  %v319 = vsel %vm317, %v318, %v316
  %v320 = vrsqrt.pop %v283
  %v321 = vmul.f32 %v320, %v283
  %v322 = vmul.f32 %v321, %v320
  %v323 = vmul.f32 0.5, %v322
  %v324 = vsub.f32 1.5, %v323
  %v325 = vmul.f32 %v320, %v324
  %v326 = vmul.f32 %v283, %v325
  %vm327 = vcmp.eq.f32.partialorder %v283, inf
  %v328 = vsel %vm327, %v283, %v326
  %vm329 = vcmp.eq.f32.partialorder %v283, 0.0
  %v330 = vand.u32 %v283, 2147483648
  %v331 = vsel %vm329, %v330, %v328
  %v332 = vadd.f32 %v295, %v307
  %v333 = vadd.f32 %v332, %v319
  %v334 = vadd.f32 %v333, %v331
  %335 = vadd.xlane.f32.xlu0 %v334
  %v336 = vpop.xlane.xlu0 %335
  %v337 = vrot.slane %v336, 4
  %v338 = vadd.f32 %v336, %v337
  %v339 = vrot.slane %v338, 2
  %v340 = vadd.f32 %v338, %v339
  %v341 = vrot.slane %v340, 1
  %v342 = vadd.f32 %v340, %v341
  %s343 = vtos %v342
  %v344 = vrcp.pop 4096.0
  %v345 = vmul.f32 4096.0, %v344
  %v346 = vsub.f32 1.0, %v345
  %v347 = vmul.f32 %v344, %v346
  %v348 = vadd.f32 %v344, %v347
  %vm349 = vweird.f32 %v344
  %v350 = vsel %vm349, %v344, %v348
  %s351 = vtos %v350
  %s352 = smul.f32 %s343, %s351
  %v353 = vstv %s352
  %v354 = vmul.f32 %v353, %v212
  %355 = vrot.lane.b32.xlu0 %v208, 127
  %v356 = vpop.permute.xlu0 %355
  %357 = vrot.lane.b32.xlu0 %v210, 127
  %v358 = vpop.permute.xlu0 %357
  %359 = vrot.lane.b32.xlu0 %v209, 127
  %v360 = vpop.permute.xlu0 %359
  %361 = vrot.lane.b32.xlu0 %v211, 127
  %v362 = vpop.permute.xlu0 %361
  %vm363 = vcmp.lt.s32.totalorder %v222, 127
  %v364 = vsel %vm363, %v356, %v360
  %v365 = vsel %vm363, %v358, %v362
  %v366 = vsel %vm363, %v360, %v356
  %v367 = vsel %vm363, %v362, %v358
  %368 = vrot.lane.b32.xlu0 %v208, 126
  %v369 = vpop.permute.xlu0 %368
  %370 = vrot.lane.b32.xlu0 %v210, 126
  %v371 = vpop.permute.xlu0 %370
  %372 = vrot.lane.b32.xlu0 %v209, 126
  %v373 = vpop.permute.xlu0 %372
  %374 = vrot.lane.b32.xlu0 %v211, 126
  %v375 = vpop.permute.xlu0 %374
  %vm376 = vcmp.lt.s32.totalorder %v222, 126
  %v377 = vsel %vm376, %v369, %v373
  %v378 = vsel %vm376, %v371, %v375
  %v379 = vsel %vm376, %v373, %v369
  %v380 = vsel %vm376, %v375, %v371
  %381 = vrot.lane.b32.xlu0 %v208, 125
  %v382 = vpop.permute.xlu0 %381
  %383 = vrot.lane.b32.xlu0 %v210, 125
  %v384 = vpop.permute.xlu0 %383
  %385 = vrot.lane.b32.xlu0 %v209, 125
  %v386 = vpop.permute.xlu0 %385
  %387 = vrot.lane.b32.xlu0 %v211, 125
  %v388 = vpop.permute.xlu0 %387
  %vm389 = vcmp.lt.s32.totalorder %v222, 125
  %v390 = vsel %vm389, %v382, %v386
  %v391 = vsel %vm389, %v384, %v388
  %v392 = vsel %vm389, %v386, %v382
  %v393 = vsel %vm389, %v388, %v384
  %v394 = vpack.c.bf16 %v210, %v208
  %v395 = vpack.c.bf16 %v211, %v209
  %v396 = vpack.c.bf16 %v365, %v364
  %v397 = vpack.c.bf16 %v367, %v366
  %v398 = vpack.c.bf16 %v378, %v377
  %v399 = vpack.c.bf16 %v380, %v379
  %v400 = vpack.c.bf16 %v391, %v390
  %v401 = vpack.c.bf16 %v393, %v392
  %v403 = vsel %vm71, %v17, 0
  %405 = vmatpush.bf16.msra.mxu0 0
  %406 = vmatpush.bf16.msra.mxu0 0
  %407 = vmatpush.bf16.msra.mxu0 0
  %408 = vmatpush.bf16.msra.mxu0 0
  %409 = vmatpush.bf16.msra.mxu0 %v400
  %410 = vmatpush.bf16.msra.mxu0 %v398
  %411 = vmatpush.bf16.msra.mxu0 %v396
  %412 = vmatpush.bf16.msra.mxu0 %v394
  %413 = vmatmul.bf16.gmra.mxu0 %v403
  %v414 = vpop.f32.mrf.mxu0
  %v415 = vadd.f32 0.0, %v414
  %v416 = vpop.f32.mrf.mxu0
  %417 = vdwg.mxu0
  %418 = vmatpush.bf16.msra.mxu0 0
  %419 = vmatpush.bf16.msra.mxu0 0
  %420 = vmatpush.bf16.msra.mxu0 0
  %421 = vmatpush.bf16.msra.mxu0 0
  %422 = vmatpush.bf16.msra.mxu0 %v401
  %423 = vmatpush.bf16.msra.mxu0 %v399
  %424 = vmatpush.bf16.msra.mxu0 %v397
  %425 = vmatpush.bf16.msra.mxu0 %v395
  %426 = vmatmul.bf16.gmra.mxu0 %v403
  %v427 = vpop.f32.mrf.mxu0
  %v428 = vadd.f32 0.0, %v427
  %v429 = vpop.f32.mrf.mxu0
  %430 = vdwg.mxu0
  %v433 = vrot.slane %v415, 1
  %v434 = vrot.slane %v428, 1
  %437 = vrot.lane.b32.xlu0 %v433, 120
  %v438 = vpop.permute.xlu0 %437
  %439 = vrot.lane.b32.xlu0 %v434, 120
  %v440 = vpop.permute.xlu0 %439
  %vm441 = vcmp.lt.s32.totalorder %v222, 120
  %v442 = vsel %vm441, %v438, %v440
  %v443 = vsel %vm441, %v440, %v438
  %v444 = vadd.f32 %v415, %v442
  %v445 = vadd.f32 %v428, %v443
  %v446 = vrot.slane %v415, 2
  %v447 = vrot.slane %v428, 2
  %450 = vrot.lane.b32.xlu0 %v446, 112
  %v451 = vpop.permute.xlu0 %450
  %452 = vrot.lane.b32.xlu0 %v447, 112
  %v453 = vpop.permute.xlu0 %452
  %vm454 = vcmp.lt.s32.totalorder %v222, 112
  %v455 = vsel %vm454, %v451, %v453
  %v456 = vsel %vm454, %v453, %v451
  %v457 = vadd.f32 %v444, %v455
  %v458 = vadd.f32 %v445, %v456
  %v459 = vrot.slane %v415, 3
  %v460 = vrot.slane %v428, 3
  %463 = vrot.lane.b32.xlu0 %v459, 104
  %v464 = vpop.permute.xlu0 %463
  %465 = vrot.lane.b32.xlu0 %v460, 104
  %v466 = vpop.permute.xlu0 %465
  %vm467 = vcmp.lt.s32.totalorder %v222, 104
  %v468 = vsel %vm467, %v464, %v466
  %v469 = vsel %vm467, %v466, %v464
  %v470 = vadd.f32 %v457, %v468
  %v471 = vadd.f32 %v458, %v469
  %473 = vset.pattern.permute.xlu0 2
  %474 = vperm.xlu0 %473, %v354
  %v475 = vpop.permute.xlu0 %474
  %v477 = vadd.f32 %v470, %v475
  %v478 = vadd.f32 %v471, %v475
  %v481 = vrot.slane %v478, 7
  %vm482 = vcmask 1040384
  %v483 = vsel %vm482, %v477, %v481
  %v485 = vlaneseq
  %vm486 = vcmp.ge.s32.totalorder %v485, 0
  %vm487 = vcmp.lt.s32.totalorder %v485, 256
  %vm488 = vmand %vm486, %vm487
  %489 = vst.msk [vmem:[%s3] sm:$0x3] %vm488, %v483
  // Predicated region
  $region14: #{single_disc_forward.1} parent=0 // pred_check
    _
  $region15: #{single_disc_forward.1} parent=0 // pred_check_branch
    %491 = sbr.rel (0) target = $region17
  $region16: #{single_disc_forward.1} parent=0 // pred_region
    _
  $region17: #{single_disc_forward.1} parent=0 // pred_fallthru
    _
  // Predicated region
  $region18: #{single_disc_forward.1} parent=0 // pred_check
    _
  $region19: #{single_disc_forward.1} parent=0 // pred_check_branch
    %493 = sbr.rel (0) target = $region21
  $region20: #{single_disc_forward.1} parent=0 // pred_region
    _
  $region21: #{single_disc_forward.1} parent=0 // pred_fallthru
    _

</llo_original>
